<compile_context>
chip_gen: v7x
topology: tpu7x:2x2x1
jax: 0.10.0
libtpu: 0.0.40
codegen_flags: <defaults>
</compile_context>

<pallas_src>
import jax
import jax.numpy as jnp
from jax.experimental import pallas as pl
from jax.experimental.pallas import tpu as pltpu


def _align8(n):
    return (n + 7) // 8 * 8


def make_soft_intro_vae_kernel(input_dim, h_dim, z_dim, row_offs):
    """Kernel factory: closes over static dims and weight-slab row offsets."""
    r1_off, rh_off, r4_off, r5_off = row_offs
    two_z = 2 * z_dim

    def kernel(x_ref, eps_ref, w_ref, b_ref, out_ref):
        x = x_ref[...]          # (TB, input_dim)  f32
        eps = eps_ref[...]      # (TB, z_dim)      f32

        # Static slices of the packed bf16 weight slab (sublane-aligned rows).
        w1 = w_ref[r1_off:r1_off + input_dim, 0:h_dim]
        wh = w_ref[rh_off:rh_off + h_dim, 0:two_z]     # fused mu|logvar head
        w4 = w_ref[r4_off:r4_off + z_dim, 0:h_dim]
        w5 = w_ref[r5_off:r5_off + h_dim, 0:input_dim]

        # Static slices of the packed f32 bias slab (one row per layer).
        b1 = b_ref[0:1, 0:h_dim]
        bh = b_ref[1:2, 0:two_z]
        b4 = b_ref[2:3, 0:h_dim]
        b5 = b_ref[3:4, 0:input_dim]

        # encode: h1 = relu(x @ W1 + b1)   (bf16 MXU inputs, f32 accumulate)
        h1 = jnp.dot(x.astype(jnp.bfloat16), w1,
                     preferred_element_type=jnp.float32) + b1
        h1 = jnp.maximum(h1, 0.0)

        # fused head: [mu | logvar] = h1 @ [W_mu | W_logvar] + [b_mu | b_logvar]
        head = jnp.dot(h1.astype(jnp.bfloat16), wh,
                       preferred_element_type=jnp.float32) + bh
        mu = head[:, 0:z_dim]
        logvar = head[:, z_dim:two_z]

        # reparameterize: z = mu + eps * exp(0.5 * logvar)   (f32, EUP exp)
        z = mu + eps * jnp.exp(0.5 * logvar)

        # decode: sigmoid(relu(z @ W4 + b4) @ W5 + b5)
        h3 = jnp.dot(z.astype(jnp.bfloat16), w4,
                     preferred_element_type=jnp.float32) + b4
        h3 = jnp.maximum(h3, 0.0)
        y = jnp.dot(h3.astype(jnp.bfloat16), w5,
                    preferred_element_type=jnp.float32) + b5

        # Single packed output slab: [recon | mu | logvar]
        out_ref[:, 0:input_dim] = jax.nn.sigmoid(y)
        out_ref[:, input_dim:input_dim + two_z] = head

    return kernel


def pack_params(p, input_dim, h_dim, z_dim):
    """Pack all weights into one bf16 slab and all biases into one f32 slab.

    Done once at init time, so it costs nothing per forward call.
    Row offsets are multiples of 8 so in-kernel slices stay tile-aligned.
    """
    two_z = 2 * z_dim
    cols = max(input_dim, h_dim, two_z)

    r1 = 0
    rh = r1 + _align8(input_dim)
    r4 = rh + _align8(h_dim)
    r5 = r4 + _align8(z_dim)
    rows = r5 + _align8(h_dim)

    w = jnp.zeros((rows, cols), jnp.float32)
    w = w.at[r1:r1 + input_dim, 0:h_dim].set(p["w1"])
    w = w.at[rh:rh + h_dim, 0:two_z].set(
        jnp.concatenate([p["w_mu"], p["w_logvar"]], axis=1))
    w = w.at[r4:r4 + z_dim, 0:h_dim].set(p["w4"])
    w = w.at[r5:r5 + h_dim, 0:input_dim].set(p["w5"])

    b = jnp.zeros((4, cols), jnp.float32)
    b = b.at[0, 0:h_dim].set(p["b1"][0])
    b = b.at[1, 0:two_z].set(
        jnp.concatenate([p["b_mu"][0], p["b_logvar"][0]]))
    b = b.at[2, 0:h_dim].set(p["b4"][0])
    b = b.at[3, 0:input_dim].set(p["b5"][0])

    return w.astype(jnp.bfloat16), b, (r1, rh, r4, r5)


def soft_intro_vae_forward(x, eps, packed, input_dim, h_dim, z_dim,
                           block_b=None):
    """x: (B, input_dim) f32, eps: (B, z_dim) f32, packed = pack_params(...)."""
    B = x.shape[0]
    w_slab, b_slab, row_offs = packed
    two_z = 2 * z_dim
    out_w = input_dim + two_z

    if block_b is None:
        block_b = min(B, 256)
    assert B % block_b == 0 and block_b % 8 == 0, "batch tile must divide B, %8"
    grid = (B // block_b,)

    kernel = make_soft_intro_vae_kernel(input_dim, h_dim, z_dim, row_offs)

    out = pl.pallas_call(
        kernel,
        out_shape=jax.ShapeDtypeStruct((B, out_w), jnp.float32),
        grid=grid,
        in_specs=[
            pl.BlockSpec((block_b, input_dim), lambda i: (i, 0)),  # x
            pl.BlockSpec((block_b, z_dim), lambda i: (i, 0)),      # eps
            pl.BlockSpec(w_slab.shape, lambda i: (0, 0)),          # weights (resident)
            pl.BlockSpec(b_slab.shape, lambda i: (0, 0)),          # biases  (resident)
        ],
        out_specs=pl.BlockSpec((block_b, out_w), lambda i: (i, 0)),
        compiler_params=pltpu.CompilerParams(
            dimension_semantics=("parallel",)),
    )(x, eps, w_slab, b_slab)

    recon = out[:, :input_dim]
    mu = out[:, input_dim:input_dim + z_dim]
    logvar = out[:, input_dim + z_dim:out_w]
    return recon, mu, logvar


def init_params(key, input_dim, h_dim, z_dim):
    """Deterministic synthetic init.  Weights stored as (in, out) f32."""
    ks = jax.random.split(key, 10)

    def lin(kw, kb, fan_in, fan_out):
        scale = 1.0 / jnp.sqrt(jnp.float32(fan_in))
        w = jax.random.uniform(kw, (fan_in, fan_out), jnp.float32, -scale, scale)
        b = jax.random.uniform(kb, (1, fan_out), jnp.float32, -scale, scale)
        return w, b

    w1, b1 = lin(ks[0], ks[1], input_dim, h_dim)
    wmu, bmu = lin(ks[2], ks[3], h_dim, z_dim)
    wlv, blv = lin(ks[4], ks[5], h_dim, z_dim)
    w4, b4 = lin(ks[6], ks[7], z_dim, h_dim)
    w5, b5 = lin(ks[8], ks[9], h_dim, input_dim)
    return dict(w1=w1, b1=b1, w_mu=wmu, b_mu=bmu, w_logvar=wlv, b_logvar=blv,
                w4=w4, b4=b4, w5=w5, b5=b5)


def reference_forward_f32(x, eps, p):
    """Pure-f32 reference (matches the PyTorch module semantics)."""
    h1 = jnp.maximum(x @ p["w1"] + p["b1"], 0.0)
    mu = h1 @ p["w_mu"] + p["b_mu"]
    logvar = h1 @ p["w_logvar"] + p["b_logvar"]
    z = mu + eps * jnp.exp(0.5 * logvar)
    h3 = jnp.maximum(z @ p["w4"] + p["b4"], 0.0)
    return jax.nn.sigmoid(h3 @ p["w5"] + p["b5"]), mu, logvar


def reference_forward_bf16(x, eps, p):
    """Reference mirroring the kernel's precision (bf16 matmul inputs, f32 acc)."""
    bf = jnp.bfloat16
    dot = lambda a, w: jnp.dot(a.astype(bf), w.astype(bf),
                               preferred_element_type=jnp.float32)
    h1 = jnp.maximum(dot(x, p["w1"]) + p["b1"], 0.0)
    mu = dot(h1, p["w_mu"]) + p["b_mu"]
    logvar = dot(h1, p["w_logvar"]) + p["b_logvar"]
    z = mu + eps * jnp.exp(0.5 * logvar)
    h3 = jnp.maximum(dot(z, p["w4"]) + p["b4"], 0.0)
    return jax.nn.sigmoid(dot(h3, p["w5"]) + p["b5"]), mu, logvar


if __name__ == "__main__":
    # Lane/MXU-friendly small dims: batch=256 (tiled 128), input_dim=128,
    # h_dim=128, z_dim=8.
    B, input_dim, h_dim, z_dim = 256, 128, 128, 8

    key = jax.random.PRNGKey(0)
    k_x, k_eps, k_p = jax.random.split(key, 3)

    x = jax.random.uniform(k_x, (B, input_dim), jnp.float32)
    # eps plays the role of torch.randn_like(std) — generated outside the
    # kernel and passed in deterministically.
    eps = jax.random.normal(k_eps, (B, z_dim), jnp.float32)

    params = init_params(k_p, input_dim, h_dim, z_dim)
    packed = pack_params(params, input_dim, h_dim, z_dim)

    recon, mu, logvar = soft_intro_vae_forward(
        x, eps, packed, input_dim, h_dim, z_dim, block_b=128)
    jax.block_until_ready((recon, mu, logvar))

    # Check against a reference with matching bf16 matmul precision (tight)...
    r_recon, r_mu, r_logvar = reference_forward_bf16(x, eps, params)
    assert jnp.allclose(recon, r_recon, atol=1e-2), "recon mismatch (bf16 ref)"
    assert jnp.allclose(mu, r_mu, atol=1e-2), "mu mismatch (bf16 ref)"
    assert jnp.allclose(logvar, r_logvar, atol=1e-2), "logvar mismatch (bf16 ref)"

    # ...and against the pure-f32 reference (looser: weights are bf16 in-kernel).
    f_recon, f_mu, f_logvar = reference_forward_f32(x, eps, params)
    assert jnp.allclose(recon, f_recon, atol=5e-2), "recon mismatch (f32 ref)"
    assert jnp.allclose(mu, f_mu, atol=5e-2), "mu mismatch (f32 ref)"
    assert jnp.allclose(logvar, f_logvar, atol=5e-2), "logvar mismatch (f32 ref)"

    print("KERNEL_OK")
</pallas_src>

<mosaic_0001>
module attributes {stable_mosaic.version = 11 : i64} {
  func.func @kernel(%arg0: i32, %arg1: memref<128x128xf32, #tpu.memory_space<vmem>>, %arg2: memref<128x8xf32, #tpu.memory_space<vmem>>, %arg3: memref<392x128xbf16, #tpu.memory_space<vmem>>, %arg4: memref<4x128xf32, #tpu.memory_space<vmem>>, %arg5: memref<128x144xf32, #tpu.memory_space<vmem>>) attributes {dimension_semantics = [#tpu.dimension_semantics<parallel>], iteration_bounds = array<i64: 2>, scalar_prefetch = 0 : i64, scratch_operands = 0 : i64, tpu.core_type = #tpu.core_type<tc>, window_params = [{transform_indices = @transform_0, window_bounds = array<i64: 128, 128>}, {transform_indices = @transform_1, window_bounds = array<i64: 128, 8>}, {pipeline_mode = #tpu.pipeline_mode<synchronous>, transform_indices = @transform_2, window_bounds = array<i64: 392, 128>}, {pipeline_mode = #tpu.pipeline_mode<synchronous>, transform_indices = @transform_3, window_bounds = array<i64: 4, 128>}, {transform_indices = @transform_4, window_bounds = array<i64: 128, 144>}]} {
    %c0 = arith.constant 0 : index
    %c0_0 = arith.constant 0 : index
    %0 = vector.load %arg1[%c0, %c0_0] : memref<128x128xf32, #tpu.memory_space<vmem>>, vector<128x128xf32>
    %c0_1 = arith.constant 0 : index
    %c0_2 = arith.constant 0 : index
    %1 = vector.load %arg2[%c0_1, %c0_2] : memref<128x8xf32, #tpu.memory_space<vmem>>, vector<128x8xf32>
    %c0_3 = arith.constant 0 : index
    %c0_4 = arith.constant 0 : index
    %2 = vector.load %arg3[%c0_3, %c0_4] : memref<392x128xbf16, #tpu.memory_space<vmem>>, vector<128x128xbf16>
    %c128 = arith.constant 128 : index
    %c0_5 = arith.constant 0 : index
    %3 = vector.load %arg3[%c128, %c0_5] : memref<392x128xbf16, #tpu.memory_space<vmem>>, vector<128x16xbf16>
    %c256 = arith.constant 256 : index
    %c0_6 = arith.constant 0 : index
    %4 = vector.load %arg3[%c256, %c0_6] : memref<392x128xbf16, #tpu.memory_space<vmem>>, vector<8x128xbf16>
    %c264 = arith.constant 264 : index
    %c0_7 = arith.constant 0 : index
    %5 = vector.load %arg3[%c264, %c0_7] : memref<392x128xbf16, #tpu.memory_space<vmem>>, vector<128x128xbf16>
    %c0_8 = arith.constant 0 : index
    %c0_9 = arith.constant 0 : index
    %6 = vector.load %arg4[%c0_8, %c0_9] : memref<4x128xf32, #tpu.memory_space<vmem>>, vector<1x128xf32>
    %c1 = arith.constant 1 : index
    %c0_10 = arith.constant 0 : index
    %7 = vector.load %arg4[%c1, %c0_10] : memref<4x128xf32, #tpu.memory_space<vmem>>, vector<1x16xf32>
    %c2 = arith.constant 2 : index
    %c0_11 = arith.constant 0 : index
    %8 = vector.load %arg4[%c2, %c0_11] : memref<4x128xf32, #tpu.memory_space<vmem>>, vector<1x128xf32>
    %c3 = arith.constant 3 : index
    %c0_12 = arith.constant 0 : index
    %9 = vector.load %arg4[%c3, %c0_12] : memref<4x128xf32, #tpu.memory_space<vmem>>, vector<1x128xf32>
    %10 = arith.truncf %0 : vector<128x128xf32> to vector<128x128xbf16>
    %cst = arith.constant dense<0.000000e+00> : vector<128x128xf32>
    %11 = tpu.matmul %10, %2, %cst {dimension_numbers = #tpu.dot_dimension_numbers<[1], [0], [0], [1], [0, 0, 1, 1], [], []>} : vector<128x128xbf16>, vector<128x128xbf16>, vector<128x128xf32> -> vector<128x128xf32>
    %12 = vector.broadcast %6 : vector<1x128xf32> to vector<128x128xf32>
    %13 = arith.addf %11, %12 : vector<128x128xf32>
    %cst_13 = arith.constant 0.000000e+00 : f32
    %14 = vector.broadcast %cst_13 : f32 to vector<128x128xf32>
    %15 = arith.maximumf %13, %14 : vector<128x128xf32>
    %16 = arith.truncf %15 : vector<128x128xf32> to vector<128x128xbf16>
    %cst_14 = arith.constant dense<0.000000e+00> : vector<128x16xf32>
    %17 = tpu.matmul %16, %3, %cst_14 {dimension_numbers = #tpu.dot_dimension_numbers<[1], [0], [0], [1], [0, 0, 1, 1], [], []>} : vector<128x128xbf16>, vector<128x16xbf16>, vector<128x16xf32> -> vector<128x16xf32>
    %18 = vector.broadcast %7 : vector<1x16xf32> to vector<128x16xf32>
    %19 = arith.addf %17, %18 : vector<128x16xf32>
    %20 = vector.extract_strided_slice %19 {offsets = [0, 0], sizes = [128, 8], strides = [1, 1]} : vector<128x16xf32> to vector<128x8xf32>
    %21 = vector.extract_strided_slice %19 {offsets = [0, 8], sizes = [128, 8], strides = [1, 1]} : vector<128x16xf32> to vector<128x8xf32>
    %cst_15 = arith.constant 5.000000e-01 : f32
    %22 = vector.broadcast %cst_15 : f32 to vector<128x8xf32>
    %23 = arith.mulf %22, %21 : vector<128x8xf32>
    %24 = math.exp %23 : vector<128x8xf32>
    %25 = arith.mulf %1, %24 : vector<128x8xf32>
    %26 = arith.addf %20, %25 : vector<128x8xf32>
    %27 = arith.truncf %26 : vector<128x8xf32> to vector<128x8xbf16>
    %cst_16 = arith.constant dense<0.000000e+00> : vector<128x128xf32>
    %28 = tpu.matmul %27, %4, %cst_16 {dimension_numbers = #tpu.dot_dimension_numbers<[1], [0], [0], [1], [0, 0, 1, 1], [], []>} : vector<128x8xbf16>, vector<8x128xbf16>, vector<128x128xf32> -> vector<128x128xf32>
    %29 = vector.broadcast %8 : vector<1x128xf32> to vector<128x128xf32>
    %30 = arith.addf %28, %29 : vector<128x128xf32>
    %cst_17 = arith.constant 0.000000e+00 : f32
    %31 = vector.broadcast %cst_17 : f32 to vector<128x128xf32>
    %32 = arith.maximumf %30, %31 : vector<128x128xf32>
    %33 = arith.truncf %32 : vector<128x128xf32> to vector<128x128xbf16>
    %cst_18 = arith.constant dense<0.000000e+00> : vector<128x128xf32>
    %34 = tpu.matmul %33, %5, %cst_18 {dimension_numbers = #tpu.dot_dimension_numbers<[1], [0], [0], [1], [0, 0, 1, 1], [], []>} : vector<128x128xbf16>, vector<128x128xbf16>, vector<128x128xf32> -> vector<128x128xf32>
    %35 = vector.broadcast %9 : vector<1x128xf32> to vector<128x128xf32>
    %36 = arith.addf %34, %35 : vector<128x128xf32>
    %37 = arith.negf %36 : vector<128x128xf32>
    %38 = math.exp %37 : vector<128x128xf32>
    %cst_19 = arith.constant 1.000000e+00 : f32
    %39 = vector.broadcast %cst_19 : f32 to vector<128x128xf32>
    %40 = arith.addf %39, %38 : vector<128x128xf32>
    %41 = arith.divf %39, %40 : vector<128x128xf32>
    %c0_20 = arith.constant 0 : index
    %c0_21 = arith.constant 0 : index
    %42 = vector.load %arg5[%c0_20, %c0_21] : memref<128x144xf32, #tpu.memory_space<vmem>>, vector<128x128xf32>
    tpu.vector_store %arg5[%c0_20, %c0_21], %41 {strides = array<i32>} : memref<128x144xf32, #tpu.memory_space<vmem>>, vector<128x128xf32>,
    %c0_22 = arith.constant 0 : index
    %c128_23 = arith.constant 128 : index
    %43 = vector.load %arg5[%c0_22, %c128_23] : memref<128x144xf32, #tpu.memory_space<vmem>>, vector<128x16xf32>
    tpu.vector_store %arg5[%c0_22, %c128_23], %19 {strides = array<i32>} : memref<128x144xf32, #tpu.memory_space<vmem>>, vector<128x16xf32>,
    return
  }
  func.func @transform_0(%arg0: i32) -> (i32, i32) {
    %c0_i32 = arith.constant 0 : i32
    %c0_i32_0 = arith.constant 0 : i32
    return %arg0, %c0_i32 : i32, i32
  }
  func.func @transform_1(%arg0: i32) -> (i32, i32) {
    %c0_i32 = arith.constant 0 : i32
    %c0_i32_0 = arith.constant 0 : i32
    return %arg0, %c0_i32 : i32, i32
  }
  func.func @transform_2(%arg0: i32) -> (i32, i32) {
    %c0_i32 = arith.constant 0 : i32
    %c0_i32_0 = arith.constant 0 : i32
    %c0_i32_1 = arith.constant 0 : i32
    return %c0_i32, %c0_i32_0 : i32, i32
  }
  func.func @transform_3(%arg0: i32) -> (i32, i32) {
    %c0_i32 = arith.constant 0 : i32
    %c0_i32_0 = arith.constant 0 : i32
    %c0_i32_1 = arith.constant 0 : i32
    return %c0_i32, %c0_i32_0 : i32, i32
  }
  func.func @transform_4(%arg0: i32) -> (i32, i32) {
    %c0_i32 = arith.constant 0 : i32
    %c0_i32_0 = arith.constant 0 : i32
    return %arg0, %c0_i32 : i32, i32
  }
}

</mosaic_0001>

<llo_original>
// kernel: tpu_custom_call.1
$region0: #{tpu_custom_call.1}
  #allocation0 [shape = 'u32[]', space=smem, size = 0x4, offset = 0x4, fixed_abs, tag = 'smem constant byte address 0x4 - core index']
  #allocation1 [shape = 'u32[144,128]{1,0:T(1,128)}', space=vmem, size = 0x12000, scoped, tag = 'internal scratch']
  %s0 = inlined_call_operand.vmem [shape: f32[256,128], index: 0, kind: input, shape index: {}]
  %s1 = inlined_call_operand.vmem [shape: f32[256,8], index: 1, kind: input, shape index: {}]
  %s2 = inlined_call_operand.hbm [shape: bf16[392,128], index: 2, kind: input, shape index: {}]
  %s3 = inlined_call_operand.vmem [shape: f32[4,128], index: 3, kind: input, shape index: {}]
  %s4 = inlined_call_operand.vmem [shape: f32[256,144], index: 4, kind: output, shape index: {}]
  %s5 = sld [smem:[#allocation0]]
  $region53: #{tpu_custom_call.1} parent=0
    _
  %s7 = ssub.s32 1, %s5
  %s8 = scalar_select 0, %s7, %s5
  $region1: #{tpu_custom_call.1} parent=0
    #allocation2 [shape = 'u8[100352]{0}', space=vmem, size = 0x18800, scoped, tag = 'input window, operand 2, single buffered']
    #allocation3 [shape = 's32[2]{0}', space=sflag, size = 0x8, scoped, tag = 'scoped memory for tpu_custom_call.1']
    %9 = vsyncpa [#allocation3], 0
    loop: start=0, step=1, limit=4
    $region2: #{tpu_custom_call.1} parent=1 // loop_pre_header
      _
    $region3: #{tpu_custom_call.1} parent=1 // loop_header
      %s11 = sphi 0, %s15
      %p12 = scmp.ge.s32.totalorder %s11, 4
      %s21 = sphi 0, %s23
      %s24 = sphi 0, %s21
      %s25 = sphi 0, %s24
      %s41 = sphi 0, %s25
      %s47 = sphi 0, %s49
      %s50 = sphi 0, %s47
      %s51 = sphi 0, %s50
      %s67 = sphi 0, %s51
      %s71 = sphi 0, %s71
      %s73 = sphi 0, %s71
      %s74 = sphi 0, %s73
      %s88 = sphi 0, %s74
      %s92 = sphi 0, %s92
      %s94 = sphi 0, %s92
      %s95 = sphi 0, %s94
      %s109 = sphi 0, %s95
      %s115 = sphi 0, %s117
      %s118 = sphi 0, %s115
      %s119 = sphi 0, %s118
      %s135 = sphi 0, %s119
    $region4: #{tpu_custom_call.1} parent=1 // loop_header_branch
      %14 = sbr.rel (%p12) target = $region8
    $region5: #{tpu_custom_call.1} parent=1 // loop_body
      %s16 = ssub.s32 %s11, 1
      %s17 = ssub.s32 %s11, 2
      %s18 = sadd.s32 %s11, 1
      %s19 = ssub.s32 %s11, %s18
      %p20 = scmp.eq.s32.totalorder %s19, 0
      %s22 = sadd.s32 %s21, 1
      %s23 = scalar_select %p20, %s21, %s22
      %p26 = pneg %p20
      %p27 = scmp.eq.s32.totalorder %s11, 1
      %p28 = por %p26, %p27
      %p29 = scmp.ne.s32.totalorder %s21, %s24
      %p30 = scmp.eq.s32.totalorder %s11, 0
      %p31 = por %p29, %p30
      %p32 = scmp.ne.s32.totalorder %s21, %s24
      %p33 = scmp.eq.s32.totalorder %s16, 1
      %p34 = por %p32, %p33
      %p35 = scmp.ne.s32.totalorder %s24, %s25
      %p36 = scmp.eq.s32.totalorder %s16, 0
      %p37 = por %p35, %p36
      %p38 = scmp.ne.s32.totalorder %s24, %s25
      %p39 = scmp.eq.s32.totalorder %s17, 1
      %p40 = por %p38, %p39
      %p42 = scmp.ne.s32.totalorder %s25, %s41
      %p43 = scmp.eq.s32.totalorder %s17, 0
      %p44 = por %p42, %p43
      %s45 = ssub.s32 %s11, %s18
      %p46 = scmp.eq.s32.totalorder %s45, 0
      %s48 = sadd.s32 %s47, 1
      %s49 = scalar_select %p46, %s47, %s48
      %p52 = pneg %p46
      %p53 = scmp.eq.s32.totalorder %s11, 1
      %p54 = por %p52, %p53
      %p55 = scmp.ne.s32.totalorder %s47, %s50
      %p56 = scmp.eq.s32.totalorder %s11, 0
      %p57 = por %p55, %p56
      %p58 = scmp.ne.s32.totalorder %s47, %s50
      %p59 = scmp.eq.s32.totalorder %s16, 1
      %p60 = por %p58, %p59
      %p61 = scmp.ne.s32.totalorder %s50, %s51
      %p62 = scmp.eq.s32.totalorder %s16, 0
      %p63 = por %p61, %p62
      %p64 = scmp.ne.s32.totalorder %s50, %s51
      %p65 = scmp.eq.s32.totalorder %s17, 1
      %p66 = por %p64, %p65
      %p68 = scmp.ne.s32.totalorder %s51, %s67
      %p69 = scmp.eq.s32.totalorder %s17, 0
      %p70 = por %p68, %p69
      %s72 = sadd.s32 %s71, 1
      %p75 = scmp.eq.s32.totalorder %s11, 1
      %p76 = scmp.ne.s32.totalorder %s71, %s73
      %p77 = scmp.eq.s32.totalorder %s11, 0
      %p78 = por %p76, %p77
      %p79 = scmp.ne.s32.totalorder %s71, %s73
      %p80 = scmp.eq.s32.totalorder %s16, 1
      %p81 = por %p79, %p80
      %p82 = scmp.ne.s32.totalorder %s73, %s74
      %p83 = scmp.eq.s32.totalorder %s16, 0
      %p84 = por %p82, %p83
      %p85 = scmp.ne.s32.totalorder %s73, %s74
      %p86 = scmp.eq.s32.totalorder %s17, 1
      %p87 = por %p85, %p86
      %p89 = scmp.ne.s32.totalorder %s74, %s88
      %p90 = scmp.eq.s32.totalorder %s17, 0
      %p91 = por %p89, %p90
      %s93 = sadd.s32 %s92, 1
      %p96 = scmp.eq.s32.totalorder %s11, 1
      %p97 = scmp.ne.s32.totalorder %s92, %s94
      %p98 = scmp.eq.s32.totalorder %s11, 0
      %p99 = por %p97, %p98
      %p100 = scmp.ne.s32.totalorder %s92, %s94
      %p101 = scmp.eq.s32.totalorder %s16, 1
      %p102 = por %p100, %p101
      %p103 = scmp.ne.s32.totalorder %s94, %s95
      %p104 = scmp.eq.s32.totalorder %s16, 0
      %p105 = por %p103, %p104
      %p106 = scmp.ne.s32.totalorder %s94, %s95
      %p107 = scmp.eq.s32.totalorder %s17, 1
      %p108 = por %p106, %p107
      %p110 = scmp.ne.s32.totalorder %s95, %s109
      %p111 = scmp.eq.s32.totalorder %s17, 0
      %p112 = por %p110, %p111
      %s113 = ssub.s32 %s11, %s18
      %p114 = scmp.eq.s32.totalorder %s113, 0
      %s116 = sadd.s32 %s115, 1
      %s117 = scalar_select %p114, %s115, %s116
      %p120 = pneg %p114
      %p121 = scmp.eq.s32.totalorder %s11, 1
      %p122 = por %p120, %p121
      %p123 = scmp.ne.s32.totalorder %s115, %s118
      %p124 = scmp.eq.s32.totalorder %s11, 0
      %p125 = por %p123, %p124
      %p126 = scmp.ne.s32.totalorder %s115, %s118
      %p127 = scmp.eq.s32.totalorder %s16, 1
      %p128 = por %p126, %p127
      %p129 = scmp.ne.s32.totalorder %s118, %s119
      %p130 = scmp.eq.s32.totalorder %s16, 0
      %p131 = por %p129, %p130
      %p132 = scmp.ne.s32.totalorder %s118, %s119
      %p133 = scmp.eq.s32.totalorder %s17, 1
      %p134 = por %p132, %p133
      %p136 = scmp.ne.s32.totalorder %s119, %s135
      %p137 = scmp.eq.s32.totalorder %s17, 0
      %p138 = por %p136, %p137
      %p139 = scmp.le.s32.totalorder 1, %s11
      %p140 = scmp.lt.s32.totalorder %s11, 3
      %p141 = pnand %p139, %p140
      %p142 = pneg %p141
      // Predicated region
      $region9: #{tpu_custom_call.1} parent=5 // pred_check
        _
      $region10: #{tpu_custom_call.1} parent=5 // pred_check_branch
        %144 = sbr.rel (%p141) target = $region12
      $region11: #{tpu_custom_call.1} parent=5 // pred_region
        %s145 = ssub.s32 %s11, 1
        // Predicated region
        $region13: #{tpu_custom_call.1} parent=11 // pred_check
          %p146 = pneg %p84
        $region14: #{tpu_custom_call.1} parent=11 // pred_check_branch
          %148 = sbr.rel (%p146) target = $region16
        $region15: #{tpu_custom_call.1} parent=11 // pred_region
          %s150 = ssub.s32 3136, 3136
          %151 = vsyncadd [#allocation3], %s150
          %s152 = sshll.u32 [#allocation2], 4
          %s153 = int_to_ptr.vmem [resolvable:$true] %s152
          %158 = dma.hbm_to_vmem [thread:$0]  %s2, 3136, %s153, [#allocation3], 64, 64, 4
        $region16: #{tpu_custom_call.1} parent=11 // pred_fallthru
          _
        // Predicated region
        $region17: #{tpu_custom_call.1} parent=11 // pred_check
          %p159 = pneg %p105
        $region18: #{tpu_custom_call.1} parent=11 // pred_check_branch
          %161 = sbr.rel (%p159) target = $region20
        $region19: #{tpu_custom_call.1} parent=11 // pred_region
          _
        $region20: #{tpu_custom_call.1} parent=11 // pred_fallthru
          _
      $region12: #{tpu_custom_call.1} parent=5 // pred_fallthru
        _
      %p162 = scmp.lt.s32.totalorder %s11, 2
      // Predicated region
      $region21: #{tpu_custom_call.1} parent=5 // pred_check
        %p163 = pneg %p162
      $region22: #{tpu_custom_call.1} parent=5 // pred_check_branch
        %165 = sbr.rel (%p163) target = $region24
      $region23: #{tpu_custom_call.1} parent=5 // pred_region
        // Predicated region
        $region25: #{tpu_custom_call.1} parent=23 // pred_check
          %p166 = pneg %p31
        $region26: #{tpu_custom_call.1} parent=23 // pred_check_branch
          %168 = sbr.rel (%p166) target = $region28
        $region27: #{tpu_custom_call.1} parent=23 // pred_region
          %s169 = smul.u32 16, %s11
          %p170 = scmp.lt.s32.totalorder %s169, 31
          %s171 = scalar_select %p170, %s169, 31
          %s172 = smul.addr %s171, 8
          %s173 = scalar_lea.vmem %s0, %s172
          %s174 = smul.u32 16, %s11
        $region28: #{tpu_custom_call.1} parent=23 // pred_fallthru
          _
        // Predicated region
        $region29: #{tpu_custom_call.1} parent=23 // pred_check
          %p175 = pneg %p57
        $region30: #{tpu_custom_call.1} parent=23 // pred_check_branch
          %177 = sbr.rel (%p175) target = $region32
        $region31: #{tpu_custom_call.1} parent=23 // pred_region
          %s178 = smul.u32 16, %s11
          %p179 = scmp.lt.s32.totalorder %s178, 31
          %s180 = scalar_select %p179, %s178, 31
          %s181 = smul.addr %s180, 8
          %s182 = scalar_lea.vmem %s1, %s181
          %s183 = smul.u32 16, %s11
        $region32: #{tpu_custom_call.1} parent=23 // pred_fallthru
          _
      $region24: #{tpu_custom_call.1} parent=5 // pred_fallthru
        _
      %p184 = scmp.le.s32.totalorder 1, %s11
      %p185 = scmp.lt.s32.totalorder %s11, 3
      %p186 = pnand %p184, %p185
      %p187 = pneg %p186
      // Predicated region
      $region33: #{tpu_custom_call.1} parent=5 // pred_check
        _
      $region34: #{tpu_custom_call.1} parent=5 // pred_check_branch
        %189 = sbr.rel (%p186) target = $region36
      $region35: #{tpu_custom_call.1} parent=5 // pred_region
        %s190 = ssub.s32 %s11, 1
        // Predicated region
        $region37: #{tpu_custom_call.1} parent=35 // pred_check
          %p191 = pneg %p84
        $region38: #{tpu_custom_call.1} parent=35 // pred_check_branch
          %193 = sbr.rel (%p191) target = $region40
        $region39: #{tpu_custom_call.1} parent=35 // pred_region
          %194 = dma.done [#allocation3], 3136
        $region40: #{tpu_custom_call.1} parent=35 // pred_fallthru
          _
        %s195 = smul.u32 16, %s16
        %p196 = scmp.lt.s32.totalorder %s195, 31
        %s197 = scalar_select %p196, %s195, 31
        %s198 = smul.addr %s197, 8
        %s199 = scalar_lea.vmem %s0, %s198
        %p200 = pneg %p37
        %p201 = pneg %p34
        %s202 = smul.u32 16, %s16
        %p203 = scmp.lt.s32.totalorder %s202, 31
        %s204 = scalar_select %p203, %s202, 31
        %s205 = smul.addr %s204, 8
        %s206 = scalar_lea.vmem %s1, %s205
        %p207 = pneg %p63
        %p208 = pneg %p60
        %p209 = pneg %p84
        %p210 = pneg %p81
        %p211 = pneg %p105
        %p212 = pneg %p102
        %p213 = pneg %p131
        %p214 = pneg %p128
        %s215 = smul.u32 16, %s16
        %p216 = scmp.lt.s32.totalorder %s215, 31
        %s217 = scalar_select %p216, %s215, 31
        %s218 = smul.addr %s217, 2
        %s219 = smul.addr %s218, 8
        %s220 = scalar_lea.vmem %s4, %s219
        %s221 = smul.u32 16, %s16
        %p222 = scmp.lt.s32.totalorder %s221, 31
        %s223 = scalar_select %p222, %s221, 31
        %s224 = smul.addr %s223, 8
        %s225 = scalar_lea.vmem %s0, %s224
        %s226 = smul.u32 16, %s16
        %s227 = smul.u32 16, %s16
        %p228 = scmp.lt.s32.totalorder %s227, 31
        %s229 = scalar_select %p228, %s227, 31
        %s230 = smul.addr %s229, 8
        %s231 = scalar_lea.vmem %s1, %s230
        %s232 = smul.u32 16, %s16
        %s233 = smul.u32 16, %s16
        %p234 = scmp.lt.s32.totalorder %s233, 31
        %s235 = scalar_select %p234, %s233, 31
        %s236 = smul.addr %s235, 2
        %s237 = smul.addr %s236, 8
        %s238 = scalar_lea.vmem %s4, %s237
        %s239 = smul.u32 16, %s16
        %v241 = vld [vmem:[%s225] sm:$0xff]
        %v242 = vld [vmem:[%s225 + $0x8] sm:$0xff]
        %v243 = vld [vmem:[%s225 + $0x10] sm:$0xff]
        %v244 = vld [vmem:[%s225 + $0x18] sm:$0xff]
        %v245 = vld [vmem:[%s225 + $0x20] sm:$0xff]
        %v246 = vld [vmem:[%s225 + $0x28] sm:$0xff]
        %v247 = vld [vmem:[%s225 + $0x30] sm:$0xff]
        %v248 = vld [vmem:[%s225 + $0x38] sm:$0xff]
        %v249 = vld [vmem:[%s225 + $0x40] sm:$0xff]
        %v250 = vld [vmem:[%s225 + $0x48] sm:$0xff]
        %v251 = vld [vmem:[%s225 + $0x50] sm:$0xff]
        %v252 = vld [vmem:[%s225 + $0x58] sm:$0xff]
        %v253 = vld [vmem:[%s225 + $0x60] sm:$0xff]
        %v254 = vld [vmem:[%s225 + $0x68] sm:$0xff]
        %v255 = vld [vmem:[%s225 + $0x70] sm:$0xff]
        %v256 = vld [vmem:[%s225 + $0x78] sm:$0xff]
        %v257 = vld [vmem:[%s231] sm:$0xff]
        %v258 = vld [vmem:[%s231 + $0x8] sm:$0xff]
        %v259 = vld [vmem:[%s231 + $0x10] sm:$0xff]
        %v260 = vld [vmem:[%s231 + $0x18] sm:$0xff]
        %v261 = vld [vmem:[%s231 + $0x20] sm:$0xff]
        %v262 = vld [vmem:[%s231 + $0x28] sm:$0xff]
        %v263 = vld [vmem:[%s231 + $0x30] sm:$0xff]
        %v264 = vld [vmem:[%s231 + $0x38] sm:$0xff]
        %v265 = vld [vmem:[%s231 + $0x40] sm:$0xff]
        %v266 = vld [vmem:[%s231 + $0x48] sm:$0xff]
        %v267 = vld [vmem:[%s231 + $0x50] sm:$0xff]
        %v268 = vld [vmem:[%s231 + $0x58] sm:$0xff]
        %v269 = vld [vmem:[%s231 + $0x60] sm:$0xff]
        %v270 = vld [vmem:[%s231 + $0x68] sm:$0xff]
        %v271 = vld [vmem:[%s231 + $0x70] sm:$0xff]
        %v272 = vld [vmem:[%s231 + $0x78] sm:$0xff]
        %v273 = vld [vmem:[#allocation2] sm:$0xf]
        %v274 = vld [vmem:[#allocation2 + $0x4] sm:$0xf]
        %v275 = vld [vmem:[#allocation2 + $0x8] sm:$0xf]
        %v276 = vld [vmem:[#allocation2 + $0xc] sm:$0xf]
        %v277 = vld [vmem:[#allocation2 + $0x10] sm:$0xf]
        %v278 = vld [vmem:[#allocation2 + $0x14] sm:$0xf]
        %v279 = vld [vmem:[#allocation2 + $0x18] sm:$0xf]
        %v280 = vld [vmem:[#allocation2 + $0x1c] sm:$0xf]
        %v281 = vld [vmem:[#allocation2 + $0x20] sm:$0xf]
        %v282 = vld [vmem:[#allocation2 + $0x24] sm:$0xf]
        %v283 = vld [vmem:[#allocation2 + $0x28] sm:$0xf]
        %v284 = vld [vmem:[#allocation2 + $0x2c] sm:$0xf]
        %v285 = vld [vmem:[#allocation2 + $0x30] sm:$0xf]
        %v286 = vld [vmem:[#allocation2 + $0x34] sm:$0xf]
        %v287 = vld [vmem:[#allocation2 + $0x38] sm:$0xf]
        %v288 = vld [vmem:[#allocation2 + $0x3c] sm:$0xf]
        %v289 = vld [vmem:[#allocation2 + $0x40] sm:$0xf]
        %v290 = vld [vmem:[#allocation2 + $0x44] sm:$0xf]
        %v291 = vld [vmem:[#allocation2 + $0x48] sm:$0xf]
        %v292 = vld [vmem:[#allocation2 + $0x4c] sm:$0xf]
        %v293 = vld [vmem:[#allocation2 + $0x50] sm:$0xf]
        %v294 = vld [vmem:[#allocation2 + $0x54] sm:$0xf]
        %v295 = vld [vmem:[#allocation2 + $0x58] sm:$0xf]
        %v296 = vld [vmem:[#allocation2 + $0x5c] sm:$0xf]
        %v297 = vld [vmem:[#allocation2 + $0x60] sm:$0xf]
        %v298 = vld [vmem:[#allocation2 + $0x64] sm:$0xf]
        %v299 = vld [vmem:[#allocation2 + $0x68] sm:$0xf]
        %v300 = vld [vmem:[#allocation2 + $0x6c] sm:$0xf]
        %v301 = vld [vmem:[#allocation2 + $0x70] sm:$0xf]
        %v302 = vld [vmem:[#allocation2 + $0x74] sm:$0xf]
        %v303 = vld [vmem:[#allocation2 + $0x78] sm:$0xf]
        %v304 = vld [vmem:[#allocation2 + $0x7c] sm:$0xf]
        %v305 = vld [vmem:[#allocation2 + $0x80] sm:$0xf]
        %v306 = vld [vmem:[#allocation2 + $0x84] sm:$0xf]
        %v307 = vld [vmem:[#allocation2 + $0x88] sm:$0xf]
        %v308 = vld [vmem:[#allocation2 + $0x8c] sm:$0xf]
        %v309 = vld [vmem:[#allocation2 + $0x90] sm:$0xf]
        %v310 = vld [vmem:[#allocation2 + $0x94] sm:$0xf]
        %v311 = vld [vmem:[#allocation2 + $0x98] sm:$0xf]
        %v312 = vld [vmem:[#allocation2 + $0x9c] sm:$0xf]
        %v313 = vld [vmem:[#allocation2 + $0xa0] sm:$0xf]
        %v314 = vld [vmem:[#allocation2 + $0xa4] sm:$0xf]
        %v315 = vld [vmem:[#allocation2 + $0xa8] sm:$0xf]
        %v316 = vld [vmem:[#allocation2 + $0xac] sm:$0xf]
        %v317 = vld [vmem:[#allocation2 + $0xb0] sm:$0xf]
        %v318 = vld [vmem:[#allocation2 + $0xb4] sm:$0xf]
        %v319 = vld [vmem:[#allocation2 + $0xb8] sm:$0xf]
        %v320 = vld [vmem:[#allocation2 + $0xbc] sm:$0xf]
        %v321 = vld [vmem:[#allocation2 + $0xc0] sm:$0xf]
        %v322 = vld [vmem:[%s3] sm:$0x1]
        %v323 = vld [vmem:[%s3 + $0x1] sm:$0x1]
        %v324 = vld [vmem:[%s3 + $0x2] sm:$0x1]
        %v325 = vld [vmem:[%s3 + $0x3] sm:$0x1]
        %v326 = vpack.c.bf16 %v242, %v241
        %v327 = vpack.c.bf16 %v244, %v243
        %v328 = vpack.c.bf16 %v246, %v245
        %v329 = vpack.c.bf16 %v248, %v247
        %v330 = vpack.c.bf16 %v250, %v249
        %v331 = vpack.c.bf16 %v252, %v251
        %v332 = vpack.c.bf16 %v254, %v253
        %v333 = vpack.c.bf16 %v256, %v255
        %v334 = vlaneseq
        %v335 = vshrl.u32 %v334, 7
        %v336 = vsub.s32 0, %v335
        %v337 = vrot.slane %v322, %v336
        %v354 = vunpack.c.l.b16 %v273
        %v355 = vunpack.c.l.b16 %v274
        %v356 = vunpack.c.l.b16 %v275
        %v357 = vunpack.c.l.b16 %v276
        %v358 = vunpack.c.l.b16 %v277
        %v359 = vunpack.c.l.b16 %v278
        %v360 = vunpack.c.l.b16 %v279
        %v361 = vunpack.c.l.b16 %v280
        %v362 = vunpack.c.l.b16 %v281
        %v363 = vunpack.c.l.b16 %v282
        %v364 = vunpack.c.l.b16 %v283
        %v365 = vunpack.c.l.b16 %v284
        %v366 = vunpack.c.l.b16 %v285
        %v367 = vunpack.c.l.b16 %v286
        %v368 = vunpack.c.l.b16 %v287
        %v369 = vunpack.c.l.b16 %v288
        %v370 = vpack.c.b16 %v355, %v354
        %v371 = vpack.c.b16 %v357, %v356
        %v372 = vpack.c.b16 %v359, %v358
        %v373 = vpack.c.b16 %v361, %v360
        %v374 = vpack.c.b16 %v363, %v362
        %v375 = vpack.c.b16 %v365, %v364
        %v376 = vpack.c.b16 %v367, %v366
        %v377 = vpack.c.b16 %v369, %v368
        %386 = vmatprep.subr.bf16.mxu0 0
        %387 = vmatpush1.bf16.msra.mxu0 %v370
        %388 = vmatprep.subr.bf16.mxu0 0
        %389 = vmatpush1.bf16.msra.mxu0 %v371
        %390 = vmatprep.subr.bf16.mxu0 0
        %391 = vmatpush1.bf16.msra.mxu0 %v372
        %392 = vmatprep.subr.bf16.mxu0 0
        %393 = vmatpush1.bf16.msra.mxu0 %v373
        %394 = vmatprep.subr.bf16.mxu0 0
        %395 = vmatpush1.bf16.msra.mxu0 %v374
        %396 = vmatprep.subr.bf16.mxu0 0
        %397 = vmatpush1.bf16.msra.mxu0 %v375
        %398 = vmatprep.subr.bf16.mxu0 0
        %399 = vmatpush1.bf16.msra.mxu0 %v376
        %400 = vmatprep.subr.bf16.mxu0 0
        %401 = vmatpush1.bf16.msra.mxu0 %v377
        %402 = vmatprep.subr.bf16.mxu0 0
        %403 = vmatpush1.bf16.msra.mxu0 0
        %404 = vmatprep.subr.bf16.mxu0 0
        %405 = vmatpush1.bf16.msra.mxu0 0
        %406 = vmatprep.subr.bf16.mxu0 0
        %407 = vmatpush1.bf16.msra.mxu0 0
        %408 = vmatprep.subr.bf16.mxu0 0
        %409 = vmatpush1.bf16.msra.mxu0 0
        %410 = vmatprep.subr.bf16.mxu0 0
        %411 = vmatpush1.bf16.msra.mxu0 0
        %412 = vmatprep.subr.bf16.mxu0 0
        %413 = vmatpush1.bf16.msra.mxu0 0
        %414 = vmatprep.subr.bf16.mxu0 0
        %415 = vmatpush1.bf16.msra.mxu0 0
        %416 = vmatprep.subr.bf16.mxu0 0
        %417 = vmatpush1.bf16.msra.mxu0 0
        %418 = vmatprep.mubr.bf16.mxu0 0
        %419 = vmatmul.mubr.bf16.gmra.mrb[0].mxu0 %v326
        %v420 = vpop.f32.mrb[0].mxu0
        %v421 = vadd.f32 %v337, %v420
        %v422 = vpop.f32.mrb[0].mxu0
        %v423 = vpop.f32.mrb[0].mxu0
        %v424 = vadd.f32 %v337, %v423
        %v425 = vpop.f32.mrb[0].mxu0
        %426 = vmatprep.mubr.bf16.mxu0 0
        %427 = vmatmul.mubr.bf16.gmra.mrb[0].mxu0 %v327
        %v428 = vpop.f32.mrb[0].mxu0
        %v429 = vadd.f32 %v337, %v428
        %v430 = vpop.f32.mrb[0].mxu0
        %v431 = vpop.f32.mrb[0].mxu0
        %v432 = vadd.f32 %v337, %v431
        %v433 = vpop.f32.mrb[0].mxu0
        %434 = vmatprep.mubr.bf16.mxu0 0
        %435 = vmatmul.mubr.bf16.gmra.mrb[0].mxu0 %v328
        %v436 = vpop.f32.mrb[0].mxu0
        %v437 = vadd.f32 %v337, %v436
        %v438 = vpop.f32.mrb[0].mxu0
        %v439 = vpop.f32.mrb[0].mxu0
        %v440 = vadd.f32 %v337, %v439
        %v441 = vpop.f32.mrb[0].mxu0
        %442 = vmatprep.mubr.bf16.mxu0 0
        %443 = vmatmul.mubr.bf16.gmra.mrb[0].mxu0 %v329
        %v444 = vpop.f32.mrb[0].mxu0
        %v445 = vadd.f32 %v337, %v444
        %v446 = vpop.f32.mrb[0].mxu0
        %v447 = vpop.f32.mrb[0].mxu0
        %v448 = vadd.f32 %v337, %v447
        %v449 = vpop.f32.mrb[0].mxu0
        %450 = vmatprep.mubr.bf16.mxu0 0
        %451 = vmatmul.mubr.bf16.gmra.mrb[0].mxu0 %v330
        %v452 = vpop.f32.mrb[0].mxu0
        %v453 = vadd.f32 %v337, %v452
        %v454 = vpop.f32.mrb[0].mxu0
        %v455 = vpop.f32.mrb[0].mxu0
        %v456 = vadd.f32 %v337, %v455
        %v457 = vpop.f32.mrb[0].mxu0
        %458 = vmatprep.mubr.bf16.mxu0 0
        %459 = vmatmul.mubr.bf16.gmra.mrb[0].mxu0 %v331
        %v460 = vpop.f32.mrb[0].mxu0
        %v461 = vadd.f32 %v337, %v460
        %v462 = vpop.f32.mrb[0].mxu0
        %v463 = vpop.f32.mrb[0].mxu0
        %v464 = vadd.f32 %v337, %v463
        %v465 = vpop.f32.mrb[0].mxu0
        %466 = vmatprep.mubr.bf16.mxu0 0
        %467 = vmatmul.mubr.bf16.gmra.mrb[0].mxu0 %v332
        %v468 = vpop.f32.mrb[0].mxu0
        %v469 = vadd.f32 %v337, %v468
        %v470 = vpop.f32.mrb[0].mxu0
        %v471 = vpop.f32.mrb[0].mxu0
        %v472 = vadd.f32 %v337, %v471
        %v473 = vpop.f32.mrb[0].mxu0
        %474 = vmatprep.mubr.bf16.mxu0 0
        %475 = vmatmul.mubr.bf16.gmra.mrb[0].mxu0 %v333
        %v476 = vpop.f32.mrb[0].mxu0
        %v477 = vadd.f32 %v337, %v476
        %v478 = vpop.f32.mrb[0].mxu0
        %v479 = vpop.f32.mrb[0].mxu0
        %v480 = vadd.f32 %v337, %v479
        %v481 = vpop.f32.mrb[0].mxu0
        %482 = vdwg.mxu0
        %v483 = vmax.f32 %v421, 0.0
        %v484 = vmax.f32 %v424, 0.0
        %v485 = vmax.f32 %v429, 0.0
        %v486 = vmax.f32 %v432, 0.0
        %v487 = vmax.f32 %v437, 0.0
        %v488 = vmax.f32 %v440, 0.0
        %v489 = vmax.f32 %v445, 0.0
        %v490 = vmax.f32 %v448, 0.0
        %v491 = vmax.f32 %v453, 0.0
        %v492 = vmax.f32 %v456, 0.0
        %v493 = vmax.f32 %v461, 0.0
        %v494 = vmax.f32 %v464, 0.0
        %v495 = vmax.f32 %v469, 0.0
        %v496 = vmax.f32 %v472, 0.0
        %v497 = vmax.f32 %v477, 0.0
        %v498 = vmax.f32 %v480, 0.0
        %v499 = vpack.c.bf16 %v484, %v483
        %v500 = vpack.c.bf16 %v486, %v485
        %v501 = vpack.c.bf16 %v488, %v487
        %v502 = vpack.c.bf16 %v490, %v489
        %v503 = vpack.c.bf16 %v492, %v491
        %v504 = vpack.c.bf16 %v494, %v493
        %v505 = vpack.c.bf16 %v496, %v495
        %v506 = vpack.c.bf16 %v498, %v497
        %v507 = vlaneseq
        %v508 = vshrl.u32 %v507, 7
        %v509 = vsub.s32 0, %v508
        %v510 = vrot.slane %v323, %v509
        %v527 = vunpack.c.l.b16 %v289
        %v528 = vunpack.c.l.b16 %v290
        %v529 = vunpack.c.l.b16 %v291
        %v530 = vunpack.c.l.b16 %v292
        %v531 = vunpack.c.l.b16 %v293
        %v532 = vunpack.c.l.b16 %v294
        %v533 = vunpack.c.l.b16 %v295
        %v534 = vunpack.c.l.b16 %v296
        %v535 = vunpack.c.l.b16 %v297
        %v536 = vunpack.c.l.b16 %v298
        %v537 = vunpack.c.l.b16 %v299
        %v538 = vunpack.c.l.b16 %v300
        %v539 = vunpack.c.l.b16 %v301
        %v540 = vunpack.c.l.b16 %v302
        %v541 = vunpack.c.l.b16 %v303
        %v542 = vunpack.c.l.b16 %v304
        %v543 = vpack.c.b16 %v528, %v527
        %v544 = vpack.c.b16 %v530, %v529
        %v545 = vpack.c.b16 %v532, %v531
        %v546 = vpack.c.b16 %v534, %v533
        %v547 = vpack.c.b16 %v536, %v535
        %v548 = vpack.c.b16 %v538, %v537
        %v549 = vpack.c.b16 %v540, %v539
        %v550 = vpack.c.b16 %v542, %v541
        %559 = vmatprep.subr.bf16.mxu0 0
        %560 = vmatpush1.bf16.msra.mxu0 %v543
        %561 = vmatprep.subr.bf16.mxu0 0
        %562 = vmatpush1.bf16.msra.mxu0 %v544
        %563 = vmatprep.subr.bf16.mxu0 0
        %564 = vmatpush1.bf16.msra.mxu0 %v545
        %565 = vmatprep.subr.bf16.mxu0 0
        %566 = vmatpush1.bf16.msra.mxu0 %v546
        %567 = vmatprep.subr.bf16.mxu0 0
        %568 = vmatpush1.bf16.msra.mxu0 %v547
        %569 = vmatprep.subr.bf16.mxu0 0
        %570 = vmatpush1.bf16.msra.mxu0 %v548
        %571 = vmatprep.subr.bf16.mxu0 0
        %572 = vmatpush1.bf16.msra.mxu0 %v549
        %573 = vmatprep.subr.bf16.mxu0 0
        %574 = vmatpush1.bf16.msra.mxu0 %v550
        %575 = vmatprep.subr.bf16.mxu0 0
        %576 = vmatpush1.bf16.msra.mxu0 0
        %577 = vmatprep.subr.bf16.mxu0 0
        %578 = vmatpush1.bf16.msra.mxu0 0
        %579 = vmatprep.subr.bf16.mxu0 0
        %580 = vmatpush1.bf16.msra.mxu0 0
        %581 = vmatprep.subr.bf16.mxu0 0
        %582 = vmatpush1.bf16.msra.mxu0 0
        %583 = vmatprep.subr.bf16.mxu0 0
        %584 = vmatpush1.bf16.msra.mxu0 0
        %585 = vmatprep.subr.bf16.mxu0 0
        %586 = vmatpush1.bf16.msra.mxu0 0
        %587 = vmatprep.subr.bf16.mxu0 0
        %588 = vmatpush1.bf16.msra.mxu0 0
        %589 = vmatprep.subr.bf16.mxu0 0
        %590 = vmatpush1.bf16.msra.mxu0 0
        %591 = vmatprep.mubr.bf16.mxu0 0
        %592 = vmatmul.mubr.bf16.gmra.mrb[0].mxu0 %v499
        %v593 = vpop.f32.mrb[0].mxu0
        %v594 = vadd.f32 %v510, %v593
        %v595 = vpop.f32.mrb[0].mxu0
        %v596 = vpop.f32.mrb[0].mxu0
        %v597 = vadd.f32 %v510, %v596
        %v598 = vpop.f32.mrb[0].mxu0
        %599 = vmatprep.mubr.bf16.mxu0 0
        %600 = vmatmul.mubr.bf16.gmra.mrb[0].mxu0 %v500
        %v601 = vpop.f32.mrb[0].mxu0
        %v602 = vadd.f32 %v510, %v601
        %v603 = vpop.f32.mrb[0].mxu0
        %v604 = vpop.f32.mrb[0].mxu0
        %v605 = vadd.f32 %v510, %v604
        %v606 = vpop.f32.mrb[0].mxu0
        %607 = vmatprep.mubr.bf16.mxu0 0
        %608 = vmatmul.mubr.bf16.gmra.mrb[0].mxu0 %v501
        %v609 = vpop.f32.mrb[0].mxu0
        %v610 = vadd.f32 %v510, %v609
        %v611 = vpop.f32.mrb[0].mxu0
        %v612 = vpop.f32.mrb[0].mxu0
        %v613 = vadd.f32 %v510, %v612
        %v614 = vpop.f32.mrb[0].mxu0
        %615 = vmatprep.mubr.bf16.mxu0 0
        %616 = vmatmul.mubr.bf16.gmra.mrb[0].mxu0 %v502
        %v617 = vpop.f32.mrb[0].mxu0
        %v618 = vadd.f32 %v510, %v617
        %v619 = vpop.f32.mrb[0].mxu0
        %v620 = vpop.f32.mrb[0].mxu0
        %v621 = vadd.f32 %v510, %v620
        %v622 = vpop.f32.mrb[0].mxu0
        %623 = vmatprep.mubr.bf16.mxu0 0
        %624 = vmatmul.mubr.bf16.gmra.mrb[0].mxu0 %v503
        %v625 = vpop.f32.mrb[0].mxu0
        %v626 = vadd.f32 %v510, %v625
        %v627 = vpop.f32.mrb[0].mxu0
        %v628 = vpop.f32.mrb[0].mxu0
        %v629 = vadd.f32 %v510, %v628
        %v630 = vpop.f32.mrb[0].mxu0
        %631 = vmatprep.mubr.bf16.mxu0 0
        %632 = vmatmul.mubr.bf16.gmra.mrb[0].mxu0 %v504
        %v633 = vpop.f32.mrb[0].mxu0
        %v634 = vadd.f32 %v510, %v633
        %v635 = vpop.f32.mrb[0].mxu0
        %v636 = vpop.f32.mrb[0].mxu0
        %v637 = vadd.f32 %v510, %v636
        %v638 = vpop.f32.mrb[0].mxu0
        %639 = vmatprep.mubr.bf16.mxu0 0
        %640 = vmatmul.mubr.bf16.gmra.mrb[0].mxu0 %v505
        %v641 = vpop.f32.mrb[0].mxu0
        %v642 = vadd.f32 %v510, %v641
        %v643 = vpop.f32.mrb[0].mxu0
        %v644 = vpop.f32.mrb[0].mxu0
        %v645 = vadd.f32 %v510, %v644
        %v646 = vpop.f32.mrb[0].mxu0
        %647 = vmatprep.mubr.bf16.mxu0 0
        %648 = vmatmul.mubr.bf16.gmra.mrb[0].mxu0 %v506
        %v649 = vpop.f32.mrb[0].mxu0
        %v650 = vadd.f32 %v510, %v649
        %v651 = vpop.f32.mrb[0].mxu0
        %v652 = vpop.f32.mrb[0].mxu0
        %v653 = vadd.f32 %v510, %v652
        %v654 = vpop.f32.mrb[0].mxu0
        %655 = vdwg.mxu0
        %v656 = vmul.f32 %v594, 0.5
        %v657 = vmul.f32 %v597, 0.5
        %v658 = vmul.f32 %v602, 0.5
        %v659 = vmul.f32 %v605, 0.5
        %v660 = vmul.f32 %v610, 0.5
        %v661 = vmul.f32 %v613, 0.5
        %v662 = vmul.f32 %v618, 0.5
        %v663 = vmul.f32 %v621, 0.5
        %v664 = vmul.f32 %v626, 0.5
        %v665 = vmul.f32 %v629, 0.5
        %v666 = vmul.f32 %v634, 0.5
        %v667 = vmul.f32 %v637, 0.5
        %v668 = vmul.f32 %v642, 0.5
        %v669 = vmul.f32 %v645, 0.5
        %v670 = vmul.f32 %v650, 0.5
        %v671 = vmul.f32 %v653, 0.5
        %v672 = vmul.f32 %v656, 1.442695
        %v673 = vpow.pop %v672
        %v674 = vmul.f32 %v657, 1.442695
        %v675 = vpow.pop %v674
        %v676 = vmul.f32 %v658, 1.442695
        %v677 = vpow.pop %v676
        %v678 = vmul.f32 %v659, 1.442695
        %v679 = vpow.pop %v678
        %v680 = vmul.f32 %v660, 1.442695
        %v681 = vpow.pop %v680
        %v682 = vmul.f32 %v661, 1.442695
        %v683 = vpow.pop %v682
        %v684 = vmul.f32 %v662, 1.442695
        %v685 = vpow.pop %v684
        %v686 = vmul.f32 %v663, 1.442695
        %v687 = vpow.pop %v686
        %v688 = vmul.f32 %v664, 1.442695
        %v689 = vpow.pop %v688
        %v690 = vmul.f32 %v665, 1.442695
        %v691 = vpow.pop %v690
        %v692 = vmul.f32 %v666, 1.442695
        %v693 = vpow.pop %v692
        %v694 = vmul.f32 %v667, 1.442695
        %v695 = vpow.pop %v694
        %v696 = vmul.f32 %v668, 1.442695
        %v697 = vpow.pop %v696
        %v698 = vmul.f32 %v669, 1.442695
        %v699 = vpow.pop %v698
        %v700 = vmul.f32 %v670, 1.442695
        %v701 = vpow.pop %v700
        %v702 = vmul.f32 %v671, 1.442695
        %v703 = vpow.pop %v702
        %720 = vrot.lane.b32.xlu0 %v673, 120
        %v721 = vpop.permute.xlu0 %720
        %722 = vrot.lane.b32.xlu0 %v675, 120
        %v723 = vpop.permute.xlu0 %722
        %724 = vrot.lane.b32.xlu0 %v677, 120
        %v725 = vpop.permute.xlu0 %724
        %726 = vrot.lane.b32.xlu0 %v679, 120
        %v727 = vpop.permute.xlu0 %726
        %728 = vrot.lane.b32.xlu0 %v681, 120
        %v729 = vpop.permute.xlu0 %728
        %730 = vrot.lane.b32.xlu0 %v683, 120
        %v731 = vpop.permute.xlu0 %730
        %732 = vrot.lane.b32.xlu0 %v685, 120
        %v733 = vpop.permute.xlu0 %732
        %734 = vrot.lane.b32.xlu0 %v687, 120
        %v735 = vpop.permute.xlu0 %734
        %736 = vrot.lane.b32.xlu0 %v689, 120
        %v737 = vpop.permute.xlu0 %736
        %738 = vrot.lane.b32.xlu0 %v691, 120
        %v739 = vpop.permute.xlu0 %738
        %740 = vrot.lane.b32.xlu0 %v693, 120
        %v741 = vpop.permute.xlu0 %740
        %742 = vrot.lane.b32.xlu0 %v695, 120
        %v743 = vpop.permute.xlu0 %742
        %744 = vrot.lane.b32.xlu0 %v697, 120
        %v745 = vpop.permute.xlu0 %744
        %746 = vrot.lane.b32.xlu0 %v699, 120
        %v747 = vpop.permute.xlu0 %746
        %748 = vrot.lane.b32.xlu0 %v701, 120
        %v749 = vpop.permute.xlu0 %748
        %750 = vrot.lane.b32.xlu0 %v703, 120
        %v751 = vpop.permute.xlu0 %750
        %v768 = vmul.f32 %v257, %v721
        %v769 = vmul.f32 %v258, %v723
        %v770 = vmul.f32 %v259, %v725
        %v771 = vmul.f32 %v260, %v727
        %v772 = vmul.f32 %v261, %v729
        %v773 = vmul.f32 %v262, %v731
        %v774 = vmul.f32 %v263, %v733
        %v775 = vmul.f32 %v264, %v735
        %v776 = vmul.f32 %v265, %v737
        %v777 = vmul.f32 %v266, %v739
        %v778 = vmul.f32 %v267, %v741
        %v779 = vmul.f32 %v268, %v743
        %v780 = vmul.f32 %v269, %v745
        %v781 = vmul.f32 %v270, %v747
        %v782 = vmul.f32 %v271, %v749
        %v783 = vmul.f32 %v272, %v751
        %v784 = vadd.f32 %v594, %v768
        %v785 = vadd.f32 %v597, %v769
        %v786 = vadd.f32 %v602, %v770
        %v787 = vadd.f32 %v605, %v771
        %v788 = vadd.f32 %v610, %v772
        %v789 = vadd.f32 %v613, %v773
        %v790 = vadd.f32 %v618, %v774
        %v791 = vadd.f32 %v621, %v775
        %v792 = vadd.f32 %v626, %v776
        %v793 = vadd.f32 %v629, %v777
        %v794 = vadd.f32 %v634, %v778
        %v795 = vadd.f32 %v637, %v779
        %v796 = vadd.f32 %v642, %v780
        %v797 = vadd.f32 %v645, %v781
        %v798 = vadd.f32 %v650, %v782
        %v799 = vadd.f32 %v653, %v783
        %v800 = vpack.c.bf16 %v785, %v784
        %v801 = vpack.c.bf16 %v787, %v786
        %v802 = vpack.c.bf16 %v789, %v788
        %v803 = vpack.c.bf16 %v791, %v790
        %v804 = vpack.c.bf16 %v793, %v792
        %v805 = vpack.c.bf16 %v795, %v794
        %v806 = vpack.c.bf16 %v797, %v796
        %v807 = vpack.c.bf16 %v799, %v798
        %v808 = vlaneseq
        %v809 = vshrl.u32 %v808, 7
        %v810 = vsub.s32 0, %v809
        %v811 = vrot.slane %v324, %v810
        %vm812 = vcmask 64512
        %v814 = vsel %vm812, %v800, 0
        %v817 = vsel %vm812, %v801, 0
        %v820 = vsel %vm812, %v802, 0
        %v823 = vsel %vm812, %v803, 0
        %v826 = vsel %vm812, %v804, 0
        %v829 = vsel %vm812, %v805, 0
        %v832 = vsel %vm812, %v806, 0
        %v835 = vsel %vm812, %v807, 0
        %vm837 = vcmask 1043456
        %v839 = vsel %vm837, %v305, 0
        %841 = vmatprep.subr.bf16.mxu0 0
        %842 = vmatpush1.bf16.msra.mxu0 %v839
        %843 = vmatprep.subr.bf16.mxu0 0
        %844 = vmatpush1.bf16.msra.mxu0 0
        %845 = vmatprep.subr.bf16.mxu0 0
        %846 = vmatpush1.bf16.msra.mxu0 0
        %847 = vmatprep.subr.bf16.mxu0 0
        %848 = vmatpush1.bf16.msra.mxu0 0
        %849 = vmatprep.subr.bf16.mxu0 0
        %850 = vmatpush1.bf16.msra.mxu0 0
        %851 = vmatprep.subr.bf16.mxu0 0
        %852 = vmatpush1.bf16.msra.mxu0 0
        %853 = vmatprep.subr.bf16.mxu0 0
        %854 = vmatpush1.bf16.msra.mxu0 0
        %855 = vmatprep.subr.bf16.mxu0 0
        %856 = vmatpush1.bf16.msra.mxu0 0
        %857 = vmatprep.subr.bf16.mxu0 0
        %858 = vmatpush1.bf16.msra.mxu0 0
        %859 = vmatprep.subr.bf16.mxu0 0
        %860 = vmatpush1.bf16.msra.mxu0 0
        %861 = vmatprep.subr.bf16.mxu0 0
        %862 = vmatpush1.bf16.msra.mxu0 0
        %863 = vmatprep.subr.bf16.mxu0 0
        %864 = vmatpush1.bf16.msra.mxu0 0
        %865 = vmatprep.subr.bf16.mxu0 0
        %866 = vmatpush1.bf16.msra.mxu0 0
        %867 = vmatprep.subr.bf16.mxu0 0
        %868 = vmatpush1.bf16.msra.mxu0 0
        %869 = vmatprep.subr.bf16.mxu0 0
        %870 = vmatpush1.bf16.msra.mxu0 0
        %871 = vmatprep.subr.bf16.mxu0 0
        %872 = vmatpush1.bf16.msra.mxu0 0
        %873 = vmatprep.mubr.bf16.mxu0 0
        %874 = vmatmul.mubr.bf16.gmra.mrb[0].mxu0 %v814
        %v875 = vpop.f32.mrb[0].mxu0
        %v876 = vadd.f32 %v811, %v875
        %v877 = vpop.f32.mrb[0].mxu0
        %v878 = vpop.f32.mrb[0].mxu0
        %v879 = vadd.f32 %v811, %v878
        %v880 = vpop.f32.mrb[0].mxu0
        %881 = vmatprep.mubr.bf16.mxu0 0
        %882 = vmatmul.mubr.bf16.gmra.mrb[0].mxu0 %v817
        %v883 = vpop.f32.mrb[0].mxu0
        %v884 = vadd.f32 %v811, %v883
        %v885 = vpop.f32.mrb[0].mxu0
        %v886 = vpop.f32.mrb[0].mxu0
        %v887 = vadd.f32 %v811, %v886
        %v888 = vpop.f32.mrb[0].mxu0
        %889 = vmatprep.mubr.bf16.mxu0 0
        %890 = vmatmul.mubr.bf16.gmra.mrb[0].mxu0 %v820
        %v891 = vpop.f32.mrb[0].mxu0
        %v892 = vadd.f32 %v811, %v891
        %v893 = vpop.f32.mrb[0].mxu0
        %v894 = vpop.f32.mrb[0].mxu0
        %v895 = vadd.f32 %v811, %v894
        %v896 = vpop.f32.mrb[0].mxu0
        %897 = vmatprep.mubr.bf16.mxu0 0
        %898 = vmatmul.mubr.bf16.gmra.mrb[0].mxu0 %v823
        %v899 = vpop.f32.mrb[0].mxu0
        %v900 = vadd.f32 %v811, %v899
        %v901 = vpop.f32.mrb[0].mxu0
        %v902 = vpop.f32.mrb[0].mxu0
        %v903 = vadd.f32 %v811, %v902
        %v904 = vpop.f32.mrb[0].mxu0
        %905 = vmatprep.mubr.bf16.mxu0 0
        %906 = vmatmul.mubr.bf16.gmra.mrb[0].mxu0 %v826
        %v907 = vpop.f32.mrb[0].mxu0
        %v908 = vadd.f32 %v811, %v907
        %v909 = vpop.f32.mrb[0].mxu0
        %v910 = vpop.f32.mrb[0].mxu0
        %v911 = vadd.f32 %v811, %v910
        %v912 = vpop.f32.mrb[0].mxu0
        %913 = vmatprep.mubr.bf16.mxu0 0
        %914 = vmatmul.mubr.bf16.gmra.mrb[0].mxu0 %v829
        %v915 = vpop.f32.mrb[0].mxu0
        %v916 = vadd.f32 %v811, %v915
        %v917 = vpop.f32.mrb[0].mxu0
        %v918 = vpop.f32.mrb[0].mxu0
        %v919 = vadd.f32 %v811, %v918
        %v920 = vpop.f32.mrb[0].mxu0
        %921 = vmatprep.mubr.bf16.mxu0 0
        %922 = vmatmul.mubr.bf16.gmra.mrb[0].mxu0 %v832
        %v923 = vpop.f32.mrb[0].mxu0
        %v924 = vadd.f32 %v811, %v923
        %v925 = vpop.f32.mrb[0].mxu0
        %v926 = vpop.f32.mrb[0].mxu0
        %v927 = vadd.f32 %v811, %v926
        %v928 = vpop.f32.mrb[0].mxu0
        %929 = vmatprep.mubr.bf16.mxu0 0
        %930 = vmatmul.mubr.bf16.gmra.mrb[0].mxu0 %v835
        %v931 = vpop.f32.mrb[0].mxu0
        %v932 = vadd.f32 %v811, %v931
        %v933 = vpop.f32.mrb[0].mxu0
        %v934 = vpop.f32.mrb[0].mxu0
        %v935 = vadd.f32 %v811, %v934
        %v936 = vpop.f32.mrb[0].mxu0
        %937 = vdwg.mxu0
        %v938 = vmax.f32 %v876, 0.0
        %v939 = vmax.f32 %v879, 0.0
        %v940 = vmax.f32 %v884, 0.0
        %v941 = vmax.f32 %v887, 0.0
        %v942 = vmax.f32 %v892, 0.0
        %v943 = vmax.f32 %v895, 0.0
        %v944 = vmax.f32 %v900, 0.0
        %v945 = vmax.f32 %v903, 0.0
        %v946 = vmax.f32 %v908, 0.0
        %v947 = vmax.f32 %v911, 0.0
        %v948 = vmax.f32 %v916, 0.0
        %v949 = vmax.f32 %v919, 0.0
        %v950 = vmax.f32 %v924, 0.0
        %v951 = vmax.f32 %v927, 0.0
        %v952 = vmax.f32 %v932, 0.0
        %v953 = vmax.f32 %v935, 0.0
        %v954 = vpack.c.bf16 %v939, %v938
        %v955 = vpack.c.bf16 %v941, %v940
        %v956 = vpack.c.bf16 %v943, %v942
        %v957 = vpack.c.bf16 %v945, %v944
        %v958 = vpack.c.bf16 %v947, %v946
        %v959 = vpack.c.bf16 %v949, %v948
        %v960 = vpack.c.bf16 %v951, %v950
        %v961 = vpack.c.bf16 %v953, %v952
        %v962 = vlaneseq
        %v963 = vshrl.u32 %v962, 7
        %v964 = vsub.s32 0, %v963
        %v965 = vrot.slane %v325, %v964
        %v982 = vunpack.c.l.b16 %v306
        %v983 = vunpack.c.l.b16 %v307
        %v984 = vunpack.c.l.b16 %v308
        %v985 = vunpack.c.l.b16 %v309
        %v986 = vunpack.c.l.b16 %v310
        %v987 = vunpack.c.l.b16 %v311
        %v988 = vunpack.c.l.b16 %v312
        %v989 = vunpack.c.l.b16 %v313
        %v990 = vunpack.c.l.b16 %v314
        %v991 = vunpack.c.l.b16 %v315
        %v992 = vunpack.c.l.b16 %v316
        %v993 = vunpack.c.l.b16 %v317
        %v994 = vunpack.c.l.b16 %v318
        %v995 = vunpack.c.l.b16 %v319
        %v996 = vunpack.c.l.b16 %v320
        %v997 = vunpack.c.l.b16 %v321
        %v998 = vpack.c.b16 %v983, %v982
        %v999 = vpack.c.b16 %v985, %v984
        %v1000 = vpack.c.b16 %v987, %v986
        %v1001 = vpack.c.b16 %v989, %v988
        %v1002 = vpack.c.b16 %v991, %v990
        %v1003 = vpack.c.b16 %v993, %v992
        %v1004 = vpack.c.b16 %v995, %v994
        %v1005 = vpack.c.b16 %v997, %v996
        %1014 = vmatprep.subr.bf16.mxu0 0
        %1015 = vmatpush1.bf16.msra.mxu0 %v998
        %1016 = vmatprep.subr.bf16.mxu0 0
        %1017 = vmatpush1.bf16.msra.mxu0 %v999
        %1018 = vmatprep.subr.bf16.mxu0 0
        %1019 = vmatpush1.bf16.msra.mxu0 %v1000
        %1020 = vmatprep.subr.bf16.mxu0 0
        %1021 = vmatpush1.bf16.msra.mxu0 %v1001
        %1022 = vmatprep.subr.bf16.mxu0 0
        %1023 = vmatpush1.bf16.msra.mxu0 %v1002
        %1024 = vmatprep.subr.bf16.mxu0 0
        %1025 = vmatpush1.bf16.msra.mxu0 %v1003
        %1026 = vmatprep.subr.bf16.mxu0 0
        %1027 = vmatpush1.bf16.msra.mxu0 %v1004
        %1028 = vmatprep.subr.bf16.mxu0 0
        %1029 = vmatpush1.bf16.msra.mxu0 %v1005
        %1030 = vmatprep.subr.bf16.mxu0 0
        %1031 = vmatpush1.bf16.msra.mxu0 0
        %1032 = vmatprep.subr.bf16.mxu0 0
        %1033 = vmatpush1.bf16.msra.mxu0 0
        %1034 = vmatprep.subr.bf16.mxu0 0
        %1035 = vmatpush1.bf16.msra.mxu0 0
        %1036 = vmatprep.subr.bf16.mxu0 0
        %1037 = vmatpush1.bf16.msra.mxu0 0
        %1038 = vmatprep.subr.bf16.mxu0 0
        %1039 = vmatpush1.bf16.msra.mxu0 0
        %1040 = vmatprep.subr.bf16.mxu0 0
        %1041 = vmatpush1.bf16.msra.mxu0 0
        %1042 = vmatprep.subr.bf16.mxu0 0
        %1043 = vmatpush1.bf16.msra.mxu0 0
        %1044 = vmatprep.subr.bf16.mxu0 0
        %1045 = vmatpush1.bf16.msra.mxu0 0
        %1046 = vmatprep.mubr.bf16.mxu0 0
        %1047 = vmatmul.mubr.bf16.gmra.mrb[0].mxu0 %v954
        %v1048 = vpop.f32.mrb[0].mxu0
        %v1049 = vadd.f32 %v965, %v1048
        %v1050 = vpop.f32.mrb[0].mxu0
        %v1051 = vpop.f32.mrb[0].mxu0
        %v1052 = vadd.f32 %v965, %v1051
        %v1053 = vpop.f32.mrb[0].mxu0
        %1054 = vmatprep.mubr.bf16.mxu0 0
        %1055 = vmatmul.mubr.bf16.gmra.mrb[0].mxu0 %v955
        %v1056 = vpop.f32.mrb[0].mxu0
        %v1057 = vadd.f32 %v965, %v1056
        %v1058 = vpop.f32.mrb[0].mxu0
        %v1059 = vpop.f32.mrb[0].mxu0
        %v1060 = vadd.f32 %v965, %v1059
        %v1061 = vpop.f32.mrb[0].mxu0
        %1062 = vmatprep.mubr.bf16.mxu0 0
        %1063 = vmatmul.mubr.bf16.gmra.mrb[0].mxu0 %v956
        %v1064 = vpop.f32.mrb[0].mxu0
        %v1065 = vadd.f32 %v965, %v1064
        %v1066 = vpop.f32.mrb[0].mxu0
        %v1067 = vpop.f32.mrb[0].mxu0
        %v1068 = vadd.f32 %v965, %v1067
        %v1069 = vpop.f32.mrb[0].mxu0
        %1070 = vmatprep.mubr.bf16.mxu0 0
        %1071 = vmatmul.mubr.bf16.gmra.mrb[0].mxu0 %v957
        %v1072 = vpop.f32.mrb[0].mxu0
        %v1073 = vadd.f32 %v965, %v1072
        %v1074 = vpop.f32.mrb[0].mxu0
        %v1075 = vpop.f32.mrb[0].mxu0
        %v1076 = vadd.f32 %v965, %v1075
        %v1077 = vpop.f32.mrb[0].mxu0
        %1078 = vmatprep.mubr.bf16.mxu0 0
        %1079 = vmatmul.mubr.bf16.gmra.mrb[0].mxu0 %v958
        %v1080 = vpop.f32.mrb[0].mxu0
        %v1081 = vadd.f32 %v965, %v1080
        %v1082 = vpop.f32.mrb[0].mxu0
        %v1083 = vpop.f32.mrb[0].mxu0
        %v1084 = vadd.f32 %v965, %v1083
        %v1085 = vpop.f32.mrb[0].mxu0
        %1086 = vmatprep.mubr.bf16.mxu0 0
        %1087 = vmatmul.mubr.bf16.gmra.mrb[0].mxu0 %v959
        %v1088 = vpop.f32.mrb[0].mxu0
        %v1089 = vadd.f32 %v965, %v1088
        %v1090 = vpop.f32.mrb[0].mxu0
        %v1091 = vpop.f32.mrb[0].mxu0
        %v1092 = vadd.f32 %v965, %v1091
        %v1093 = vpop.f32.mrb[0].mxu0
        %1094 = vmatprep.mubr.bf16.mxu0 0
        %1095 = vmatmul.mubr.bf16.gmra.mrb[0].mxu0 %v960
        %v1096 = vpop.f32.mrb[0].mxu0
        %v1097 = vadd.f32 %v965, %v1096
        %v1098 = vpop.f32.mrb[0].mxu0
        %v1099 = vpop.f32.mrb[0].mxu0
        %v1100 = vadd.f32 %v965, %v1099
        %v1101 = vpop.f32.mrb[0].mxu0
        %1102 = vmatprep.mubr.bf16.mxu0 0
        %1103 = vmatmul.mubr.bf16.gmra.mrb[0].mxu0 %v961
        %v1104 = vpop.f32.mrb[0].mxu0
        %v1105 = vadd.f32 %v965, %v1104
        %v1106 = vpop.f32.mrb[0].mxu0
        %v1107 = vpop.f32.mrb[0].mxu0
        %v1108 = vadd.f32 %v965, %v1107
        %v1109 = vpop.f32.mrb[0].mxu0
        %1110 = vdwg.mxu0
        %v1111 = vxor.u32 %v1049, 2147483648
        %v1112 = vxor.u32 %v1052, 2147483648
        %v1113 = vxor.u32 %v1057, 2147483648
        %v1114 = vxor.u32 %v1060, 2147483648
        %v1115 = vxor.u32 %v1065, 2147483648
        %v1116 = vxor.u32 %v1068, 2147483648
        %v1117 = vxor.u32 %v1073, 2147483648
        %v1118 = vxor.u32 %v1076, 2147483648
        %v1119 = vxor.u32 %v1081, 2147483648
        %v1120 = vxor.u32 %v1084, 2147483648
        %v1121 = vxor.u32 %v1089, 2147483648
        %v1122 = vxor.u32 %v1092, 2147483648
        %v1123 = vxor.u32 %v1097, 2147483648
        %v1124 = vxor.u32 %v1100, 2147483648
        %v1125 = vxor.u32 %v1105, 2147483648
        %v1126 = vxor.u32 %v1108, 2147483648
        %v1127 = vmul.f32 %v1111, 1.442695
        %v1128 = vpow.pop %v1127
        %v1129 = vmul.f32 %v1112, 1.442695
        %v1130 = vpow.pop %v1129
        %v1131 = vmul.f32 %v1113, 1.442695
        %v1132 = vpow.pop %v1131
        %v1133 = vmul.f32 %v1114, 1.442695
        %v1134 = vpow.pop %v1133
        %v1135 = vmul.f32 %v1115, 1.442695
        %v1136 = vpow.pop %v1135
        %v1137 = vmul.f32 %v1116, 1.442695
        %v1138 = vpow.pop %v1137
        %v1139 = vmul.f32 %v1117, 1.442695
        %v1140 = vpow.pop %v1139
        %v1141 = vmul.f32 %v1118, 1.442695
        %v1142 = vpow.pop %v1141
        %v1143 = vmul.f32 %v1119, 1.442695
        %v1144 = vpow.pop %v1143
        %v1145 = vmul.f32 %v1120, 1.442695
        %v1146 = vpow.pop %v1145
        %v1147 = vmul.f32 %v1121, 1.442695
        %v1148 = vpow.pop %v1147
        %v1149 = vmul.f32 %v1122, 1.442695
        %v1150 = vpow.pop %v1149
        %v1151 = vmul.f32 %v1123, 1.442695
        %v1152 = vpow.pop %v1151
        %v1153 = vmul.f32 %v1124, 1.442695
        %v1154 = vpow.pop %v1153
        %v1155 = vmul.f32 %v1125, 1.442695
        %v1156 = vpow.pop %v1155
        %v1157 = vmul.f32 %v1126, 1.442695
        %v1158 = vpow.pop %v1157
        %v1159 = vadd.f32 %v1128, 1.0
        %v1160 = vadd.f32 %v1130, 1.0
        %v1161 = vadd.f32 %v1132, 1.0
        %v1162 = vadd.f32 %v1134, 1.0
        %v1163 = vadd.f32 %v1136, 1.0
        %v1164 = vadd.f32 %v1138, 1.0
        %v1165 = vadd.f32 %v1140, 1.0
        %v1166 = vadd.f32 %v1142, 1.0
        %v1167 = vadd.f32 %v1144, 1.0
        %v1168 = vadd.f32 %v1146, 1.0
        %v1169 = vadd.f32 %v1148, 1.0
        %v1170 = vadd.f32 %v1150, 1.0
        %v1171 = vadd.f32 %v1152, 1.0
        %v1172 = vadd.f32 %v1154, 1.0
        %v1173 = vadd.f32 %v1156, 1.0
        %v1174 = vadd.f32 %v1158, 1.0
        %v1175 = vrcp.pop %v1159
        %v1176 = vmul.f32 1.0, %v1175
        %v1177 = vrcp.pop %v1160
        %v1178 = vmul.f32 1.0, %v1177
        %v1179 = vrcp.pop %v1161
        %v1180 = vmul.f32 1.0, %v1179
        %v1181 = vrcp.pop %v1162
        %v1182 = vmul.f32 1.0, %v1181
        %v1183 = vrcp.pop %v1163
        %v1184 = vmul.f32 1.0, %v1183
        %v1185 = vrcp.pop %v1164
        %v1186 = vmul.f32 1.0, %v1185
        %v1187 = vrcp.pop %v1165
        %v1188 = vmul.f32 1.0, %v1187
        %v1189 = vrcp.pop %v1166
        %v1190 = vmul.f32 1.0, %v1189
        %v1191 = vrcp.pop %v1167
        %v1192 = vmul.f32 1.0, %v1191
        %v1193 = vrcp.pop %v1168
        %v1194 = vmul.f32 1.0, %v1193
        %v1195 = vrcp.pop %v1169
        %v1196 = vmul.f32 1.0, %v1195
        %v1197 = vrcp.pop %v1170
        %v1198 = vmul.f32 1.0, %v1197
        %v1199 = vrcp.pop %v1171
        %v1200 = vmul.f32 1.0, %v1199
        %v1201 = vrcp.pop %v1172
        %v1202 = vmul.f32 1.0, %v1201
        %v1203 = vrcp.pop %v1173
        %v1204 = vmul.f32 1.0, %v1203
        %v1205 = vrcp.pop %v1174
        %v1206 = vmul.f32 1.0, %v1205
        %1207 = vst [vmem:[%s238] sm:$0xff] %v1176
        %1208 = vst [vmem:[%s238 + $0x10] sm:$0xff] %v1178
        %1209 = vst [vmem:[%s238 + $0x20] sm:$0xff] %v1180
        %1210 = vst [vmem:[%s238 + $0x30] sm:$0xff] %v1182
        %1211 = vst [vmem:[%s238 + $0x40] sm:$0xff] %v1184
        %1212 = vst [vmem:[%s238 + $0x50] sm:$0xff] %v1186
        %1213 = vst [vmem:[%s238 + $0x60] sm:$0xff] %v1188
        %1214 = vst [vmem:[%s238 + $0x70] sm:$0xff] %v1190
        %1215 = vst [vmem:[%s238 + $0x80] sm:$0xff] %v1192
        %1216 = vst [vmem:[%s238 + $0x90] sm:$0xff] %v1194
        %1217 = vst [vmem:[%s238 + $0xa0] sm:$0xff] %v1196
        %1218 = vst [vmem:[%s238 + $0xb0] sm:$0xff] %v1198
        %1219 = vst [vmem:[%s238 + $0xc0] sm:$0xff] %v1200
        %1220 = vst [vmem:[%s238 + $0xd0] sm:$0xff] %v1202
        %1221 = vst [vmem:[%s238 + $0xe0] sm:$0xff] %v1204
        %1222 = vst [vmem:[%s238 + $0xf0] sm:$0xff] %v1206
        %vm1223 = vcmask 130048
        %1224 = vst.msk [vmem:[%s238 + $0x8] sm:$0xff] %vm1223, %v594
        %1225 = vst.msk [vmem:[%s238 + $0x18] sm:$0xff] %vm1223, %v597
        %1226 = vst.msk [vmem:[%s238 + $0x28] sm:$0xff] %vm1223, %v602
        %1227 = vst.msk [vmem:[%s238 + $0x38] sm:$0xff] %vm1223, %v605
        %1228 = vst.msk [vmem:[%s238 + $0x48] sm:$0xff] %vm1223, %v610
        %1229 = vst.msk [vmem:[%s238 + $0x58] sm:$0xff] %vm1223, %v613
        %1230 = vst.msk [vmem:[%s238 + $0x68] sm:$0xff] %vm1223, %v618
        %1231 = vst.msk [vmem:[%s238 + $0x78] sm:$0xff] %vm1223, %v621
        %1232 = vst.msk [vmem:[%s238 + $0x88] sm:$0xff] %vm1223, %v626
        %1233 = vst.msk [vmem:[%s238 + $0x98] sm:$0xff] %vm1223, %v629
        %1234 = vst.msk [vmem:[%s238 + $0xa8] sm:$0xff] %vm1223, %v634
        %1235 = vst.msk [vmem:[%s238 + $0xb8] sm:$0xff] %vm1223, %v637
        %1236 = vst.msk [vmem:[%s238 + $0xc8] sm:$0xff] %vm1223, %v642
        %1237 = vst.msk [vmem:[%s238 + $0xd8] sm:$0xff] %vm1223, %v645
        %1238 = vst.msk [vmem:[%s238 + $0xe8] sm:$0xff] %vm1223, %v650
        %1239 = vst.msk [vmem:[%s238 + $0xf8] sm:$0xff] %vm1223, %v653
        %s1240 = smul.u32 16, %s16
        %p1241 = scmp.lt.s32.totalorder %s1240, 31
        %s1242 = scalar_select %p1241, %s1240, 31
        %s1243 = smul.addr %s1242, 2
        %s1244 = smul.addr %s1243, 8
        %s1245 = scalar_lea.vmem %s4, %s1244
        // Predicated region
        $region41: #{tpu_custom_call.1} parent=35 // pred_check
          %p1246 = pneg %p128
        $region42: #{tpu_custom_call.1} parent=35 // pred_check_branch
          %1248 = sbr.rel (%p1246) target = $region44
        $region43: #{tpu_custom_call.1} parent=35 // pred_region
          %s1249 = smul.u32 16, %s16
        $region44: #{tpu_custom_call.1} parent=35 // pred_fallthru
          _
      $region36: #{tpu_custom_call.1} parent=5 // pred_fallthru
        _
      %p1250 = scmp.le.s32.totalorder 2, %s11
      // Predicated region
      $region45: #{tpu_custom_call.1} parent=5 // pred_check
        %p1251 = pneg %p1250
      $region46: #{tpu_custom_call.1} parent=5 // pred_check_branch
        %1253 = sbr.rel (%p1251) target = $region48
      $region47: #{tpu_custom_call.1} parent=5 // pred_region
        %s1254 = ssub.s32 %s11, 2
        // Predicated region
        $region49: #{tpu_custom_call.1} parent=47 // pred_check
          %p1255 = pneg %p134
        $region50: #{tpu_custom_call.1} parent=47 // pred_check_branch
          %1257 = sbr.rel (%p1255) target = $region52
        $region51: #{tpu_custom_call.1} parent=47 // pred_region
          %s1258 = smul.u32 16, %s17
          %p1259 = scmp.lt.s32.totalorder %s1258, 31
          %s1260 = scalar_select %p1259, %s1258, 31
          %s1261 = smul.addr %s1260, 2
          %s1262 = smul.addr %s1261, 8
          %s1263 = scalar_lea.vmem %s4, %s1262
        $region52: #{tpu_custom_call.1} parent=47 // pred_fallthru
          _
      $region48: #{tpu_custom_call.1} parent=5 // pred_fallthru
        _
    $region6: #{tpu_custom_call.1} parent=1 // loop_footer
      %s15 = sadd.s32 1, %s11
    $region7: #{tpu_custom_call.1} parent=1 // loop_footer_branch
      %10 = sbr.rel target = $region3
    $region8: #{tpu_custom_call.1} parent=1 // loop_exit
      _
    %1264 = vsyncpa [#allocation3], 1
    %s1265 = scalar_lea.sflag [#allocation3], 1
    %1266 = vsyncpa %s1265, 1

</llo_original>
